<compile_context>
chip_gen: v5e
topology: v5e:2x2
jax: 0.10.0
libtpu: 0.0.40
codegen_flags: <defaults>
</compile_context>

<pallas_src>
import functools
import math

import jax
import jax.numpy as jnp
from jax import lax
from jax.experimental import pallas as pl
from jax.experimental.pallas import tpu as pltpu


# ---------------------------------------------------------------------------
# Kernel 1: dual-expert (vision / language) tiled linear projection
# ---------------------------------------------------------------------------
def _dual_expert_kernel(counts_ref, x_ref, mask_ref, wv_ref, wl_ref, *rest,
                        has_vbias, tm):
    if has_vbias:
        bv_ref, o_ref, acc_v_ref, acc_l_ref = rest
    else:
        bv_ref = None
        o_ref, acc_v_ref, acc_l_ref = rest

    ti = pl.program_id(0)
    ki = pl.program_id(2)
    nk = pl.num_programs(2)

    @pl.when(ki == 0)
    def _init():
        acc_v_ref[...] = jnp.zeros_like(acc_v_ref)
        acc_l_ref[...] = jnp.zeros_like(acc_l_ref)

    x = x_ref[...]                     # (tm, tk), kept in input dtype (bf16 -> MXU)
    n_vis = counts_ref[ti]             # scalar from SMEM (prefetched)

    # MXU-only inner loop: pure blocks run one matmul, mixed blocks run both.
    # The per-token select is hoisted to the finalize step.
    @pl.when(n_vis > 0)
    def _vision():
        acc_v_ref[...] += jnp.dot(x, wv_ref[...], preferred_element_type=jnp.float32)

    @pl.when(n_vis < tm)
    def _language():
        acc_l_ref[...] += jnp.dot(x, wl_ref[...], preferred_element_type=jnp.float32)

    @pl.when(ki == nk - 1)
    def _finalize():
        out_v = acc_v_ref[...]
        if has_vbias:                  # vision expert bias only, added in f32
            out_v = out_v + bv_ref[...].astype(jnp.float32)
        o_ref[...] = jnp.where(mask_ref[...] != 0, out_v,
                               acc_l_ref[...]).astype(o_ref.dtype)


def dual_expert_linear(x, vision_token_mask, wv, wl, bias_v=None, *,
                       tm=256, tn=512, tk=1024):
    """x: [T, H]; mask: [T] bool; wv/wl: [H, O]; bias_v: [O] or None -> [T, O]."""
    T, H = x.shape
    O = wv.shape[1]
    tm = min(tm, T)
    tn = min(tn, O)
    tk = min(tk, H)
    assert T % tm == 0 and O % tn == 0 and H % tk == 0

    counts = jnp.sum(vision_token_mask.reshape(T // tm, tm), axis=1).astype(jnp.int32)
    mask2 = vision_token_mask.astype(jnp.int32).reshape(T, 1)

    kernel = functools.partial(_dual_expert_kernel,
                               has_vbias=bias_v is not None, tm=tm)

    # Expert weight index_maps clamp the K-block index when that expert is
    # unused for the token block, so the unused expert's tile is DMA'd at most
    # once per (ti, ji) run instead of once per K step.
    def wv_map(ti, ji, ki, cnt):
        return (jnp.where(cnt[ti] > 0, ki, 0), ji)

    def wl_map(ti, ji, ki, cnt):
        return (jnp.where(cnt[ti] < tm, ki, 0), ji)

    in_specs = [
        pl.BlockSpec((tm, tk), lambda ti, ji, ki, cnt: (ti, ki)),   # x
        pl.BlockSpec((tm, 1),  lambda ti, ji, ki, cnt: (ti, 0)),    # vision mask
        pl.BlockSpec((tk, tn), wv_map),                             # W vision
        pl.BlockSpec((tk, tn), wl_map),                             # W language
    ]
    operands = [x, mask2, wv, wl]
    if bias_v is not None:
        in_specs.append(pl.BlockSpec((1, tn), lambda ti, ji, ki, cnt: (0, ji)))
        operands.append(bias_v.reshape(1, O))

    return pl.pallas_call(
        kernel,
        out_shape=jax.ShapeDtypeStruct((T, O), x.dtype),
        grid_spec=pltpu.PrefetchScalarGridSpec(
            num_scalar_prefetch=1,
            grid=(T // tm, O // tn, H // tk),
            in_specs=in_specs,
            out_specs=pl.BlockSpec((tm, tn), lambda ti, ji, ki, cnt: (ti, ji)),
            scratch_shapes=[pltpu.VMEM((tm, tn), jnp.float32),      # vision acc
                            pltpu.VMEM((tm, tn), jnp.float32)],     # language acc
        ),
        compiler_params=pltpu.CompilerParams(
            dimension_semantics=("parallel", "parallel", "arbitrary")),
    )(counts, *operands)


# ---------------------------------------------------------------------------
# Kernel 2: fused RoPE + flash (online-softmax) causal GQA attention
# ---------------------------------------------------------------------------
def _flash_rope_kernel(q_ref, k_ref, v_ref, cq_ref, sq_ref, ck_ref, sk_ref,
                       o_ref, q_scr, m_scr, l_scr, acc_scr, *,
                       scale, group, head_dim, tq, tkv):
    qi = pl.program_id(0)
    ki = pl.program_id(2)
    nk = pl.num_programs(2)
    D = head_dim
    half = D // 2
    q_start = qi * tq
    k_start = ki * tkv

    @pl.when(ki == 0)
    def _init():
        m_scr[...] = jnp.full_like(m_scr, -jnp.inf)
        l_scr[...] = jnp.zeros_like(l_scr)
        acc_scr[...] = jnp.zeros_like(acc_scr)
        # RoPE + 1/sqrt(D) scale on each q head of the group, once per q tile.
        cq = cq_ref[...]
        sq = sq_ref[...]
        for h in range(group):
            qh = q_ref[:, h * D:(h + 1) * D].astype(jnp.float32)
            qh = (qh * cq + pltpu.roll(qh, shift=half, axis=1) * sq) * scale
            q_scr[h] = qh.astype(q_scr.dtype)

    def _attend(masked):
        # RoPE on the resident K block (once per kv block, shared by the group).
        kx = k_ref[...].astype(jnp.float32)
        kx = kx * ck_ref[...] + pltpu.roll(kx, shift=half, axis=1) * sk_ref[...]
        kx = kx.astype(k_ref.dtype)
        v = v_ref[...]
        if masked:
            row = q_start + lax.broadcasted_iota(jnp.int32, (tq, tkv), 0)
            col = k_start + lax.broadcasted_iota(jnp.int32, (tq, tkv), 1)
            keep = row >= col
        for h in range(group):
            # Contract last dims directly — no k.T materialization.
            s = lax.dot_general(q_scr[h], kx, (((1,), (1,)), ((), ())),
                                preferred_element_type=jnp.float32)
            if masked:
                s = jnp.where(keep, s, -1e30)   # scores stay f32; -1e30 is safe
            m_prev = m_scr[h]
            m_new = jnp.maximum(m_prev, jnp.max(s, axis=-1, keepdims=True))
            alpha = jnp.exp(m_prev - m_new)
            p = jnp.exp(s - m_new)
            l_scr[h] = alpha * l_scr[h] + jnp.sum(p, axis=-1, keepdims=True)
            acc_scr[h] = alpha * acc_scr[h] + jnp.dot(
                p.astype(v.dtype), v, preferred_element_type=jnp.float32)
            m_scr[h] = m_new

    fully_unmasked = k_start + tkv - 1 <= q_start            # below the diagonal
    partially_masked = jnp.logical_and(k_start + tkv - 1 > q_start,
                                       k_start <= q_start + tq - 1)

    @pl.when(fully_unmasked)
    def _no_mask():
        _attend(masked=False)

    @pl.when(partially_masked)
    def _diag():
        _attend(masked=True)

    @pl.when(ki == nk - 1)
    def _finalize():
        for h in range(group):
            # approx reciprocal (~2^-12 rel err) is fine for bf16 outputs.
            o_ref[:, h * D:(h + 1) * D] = (
                acc_scr[h] * pl.reciprocal(l_scr[h], approx=True)
            ).astype(o_ref.dtype)


def flash_rope_gqa_attention(qkv, cos_full, sin_signed, *, num_heads,
                             num_kv_heads, head_dim, scale, tq=256, tkv=256):
    """qkv: [T, (NH+2NKV)*D] un-roped token-major slab -> context [T, NH*D]."""
    T = qkv.shape[0]
    D = head_dim
    assert num_heads % num_kv_heads == 0
    group = num_heads // num_kv_heads
    tq = min(tq, T)
    tkv = min(tkv, T)
    assert T % tq == 0 and T % tkv == 0

    def kv_block(qi, ki):
        # Clamp past the causal frontier so fully-masked kv blocks re-use the
        # previous block index and Pallas skips their DMA entirely.
        return jnp.minimum(ki, ((qi + 1) * tq - 1) // tkv)

    q_map = lambda qi, g, ki: (qi, g)
    k_map = lambda qi, g, ki: (kv_block(qi, ki), num_heads + g)
    v_map = lambda qi, g, ki: (kv_block(qi, ki), num_heads + num_kv_heads + g)
    cq_map = lambda qi, g, ki: (qi, 0)
    ck_map = lambda qi, g, ki: (kv_block(qi, ki), 0)

    kernel = functools.partial(_flash_rope_kernel, scale=scale, group=group,
                               head_dim=D, tq=tq, tkv=tkv)
    return pl.pallas_call(
        kernel,
        out_shape=jax.ShapeDtypeStruct((T, num_heads * D), qkv.dtype),
        grid=(T // tq, num_kv_heads, T // tkv),
        in_specs=[
            pl.BlockSpec((tq, group * D), q_map),   # all q heads of this kv group
            pl.BlockSpec((tkv, D), k_map),          # shared K head
            pl.BlockSpec((tkv, D), v_map),          # shared V head
            pl.BlockSpec((tq, D), cq_map),          # cos for q rows
            pl.BlockSpec((tq, D), cq_map),          # sin (signed) for q rows
            pl.BlockSpec((tkv, D), ck_map),         # cos for k rows
            pl.BlockSpec((tkv, D), ck_map),         # sin (signed) for k rows
        ],
        out_specs=pl.BlockSpec((tq, group * D), q_map),
        scratch_shapes=[
            pltpu.VMEM((group, tq, D), qkv.dtype),    # roped + scaled q
            pltpu.VMEM((group, tq, 1), jnp.float32),  # running max
            pltpu.VMEM((group, tq, 1), jnp.float32),  # running denominator
            pltpu.VMEM((group, tq, D), jnp.float32),  # running numerator
        ],
        compiler_params=pltpu.CompilerParams(
            dimension_semantics=("parallel", "parallel", "arbitrary")),
    )(qkv, qkv, qkv, cos_full, sin_signed, cos_full, sin_signed)


# ---------------------------------------------------------------------------
# Full forward (glue in plain JAX, hot paths in Pallas)
# ---------------------------------------------------------------------------
def vision_expert_attention(hidden_states, positions, vision_token_mask, params, *,
                            num_heads, num_kv_heads, head_dim, rope_base=500000.0,
                            tm_tokens=256, tn=512, tk=1024, tq=256, tkv=256):
    T, H = hidden_states.shape
    D = head_dim
    scale = 1.0 / math.sqrt(D)

    # --- dual-expert QKV projection (vision expert has bias, language does not)
    qkv = dual_expert_linear(hidden_states, vision_token_mask,
                             params["wqkv_vision"], params["wqkv_language"],
                             bias_v=params["bqkv_vision"],
                             tm=tm_tokens, tn=tn, tk=tk)

    # --- rotary tables (neox style, base=500000), full lane width, sign folded
    half = D // 2
    inv_freq = 1.0 / (rope_base ** (jnp.arange(half, dtype=jnp.float32) * 2.0 / D))
    ang = positions.astype(jnp.float32)[:, None] * inv_freq[None, :]
    cos_full = jnp.concatenate([jnp.cos(ang), jnp.cos(ang)], axis=-1)     # [T, D]
    sin_signed = jnp.concatenate([-jnp.sin(ang), jnp.sin(ang)], axis=-1)  # [T, D]

    # --- fused RoPE + causal flash GQA attention straight from the qkv slab
    ctx = flash_rope_gqa_attention(qkv, cos_full, sin_signed,
                                   num_heads=num_heads, num_kv_heads=num_kv_heads,
                                   head_dim=D, scale=scale, tq=tq, tkv=tkv)

    # --- dual-expert output dense (no bias for either expert)
    return dual_expert_linear(ctx, vision_token_mask,
                              params["wdense_vision"], params["wdense_language"],
                              bias_v=None, tm=tm_tokens, tn=tn, tk=tk)


# ---------------------------------------------------------------------------
# Pure-JAX reference (for correctness check)
# ---------------------------------------------------------------------------
def _reference(hidden_states, positions, vision_token_mask, params, *,
               num_heads, num_kv_heads, head_dim, rope_base=500000.0):
    T, H = hidden_states.shape
    D = head_dim
    scale = 1.0 / math.sqrt(D)
    group = num_heads // num_kv_heads
    q_size = num_heads * D
    kv_size = num_kv_heads * D

    x = hidden_states.astype(jnp.float32)
    wqv = params["wqkv_vision"].astype(jnp.float32)
    bqv = params["bqkv_vision"].astype(jnp.float32)
    wql = params["wqkv_language"].astype(jnp.float32)
    wdv = params["wdense_vision"].astype(jnp.float32)
    wdl = params["wdense_language"].astype(jnp.float32)
    mask = vision_token_mask[:, None]

    qkv = jnp.where(mask, x @ wqv + bqv, x @ wql)

    half = D // 2
    inv_freq = 1.0 / (rope_base ** (jnp.arange(half, dtype=jnp.float32) * 2.0 / D))
    ang = positions.astype(jnp.float32)[:, None] * inv_freq[None, :]
    cos_full = jnp.concatenate([jnp.cos(ang), jnp.cos(ang)], axis=-1)
    sin_signed = jnp.concatenate([-jnp.sin(ang), jnp.sin(ang)], axis=-1)

    def rope(t):
        th = t.reshape(T, -1, D)
        rolled = jnp.roll(th, half, axis=-1)
        return (th * cos_full[:, None, :] + rolled * sin_signed[:, None, :]).reshape(T, -1)

    q = rope(qkv[:, :q_size])
    k = rope(qkv[:, q_size:q_size + kv_size])
    v = qkv[:, q_size + kv_size:]

    qh = q.reshape(T, num_heads, D)
    kh = jnp.repeat(k.reshape(T, num_kv_heads, D), group, axis=1)
    vh = jnp.repeat(v.reshape(T, num_kv_heads, D), group, axis=1)

    s = jnp.einsum("qhd,khd->hqk", qh, kh) * scale
    causal = jnp.tril(jnp.ones((T, T), dtype=bool))
    s = jnp.where(causal[None], s, -jnp.inf)
    p = jax.nn.softmax(s, axis=-1)
    ctx = jnp.einsum("hqk,khd->qhd", p, vh).reshape(T, q_size)

    return jnp.where(mask, ctx @ wdv, ctx @ wdl)


# ---------------------------------------------------------------------------
# Driver
# ---------------------------------------------------------------------------
if __name__ == "__main__":
    T = 64                     # number of flattened tokens
    NUM_HEADS = 2              # num_attention_heads (small)
    NUM_KV_HEADS = 1           # num_multi_query_heads
    HEAD_DIM = 128             # realistic (lane-dense) head_dim
    H = NUM_HEADS * HEAD_DIM                                    # 256
    QKV_SIZE = (NUM_HEADS + 2 * NUM_KV_HEADS) * HEAD_DIM        # 512

    dtype = jnp.bfloat16
    key = jax.random.PRNGKey(0)
    ks = jax.random.split(key, 6)

    hidden_states = jax.random.normal(ks[0], (T, H), jnp.float32).astype(dtype)
    positions = jnp.arange(T, dtype=jnp.int32)
    # With tm=16: blocks 0-1 pure vision, block 2 mixed (8/8), block 3 pure language.
    vision_token_mask = jnp.arange(T) < 40

    params = {
        "wqkv_vision":     (0.05 * jax.random.normal(ks[1], (H, QKV_SIZE), jnp.float32)).astype(dtype),
        "bqkv_vision":     (0.05 * jax.random.normal(ks[2], (QKV_SIZE,), jnp.float32)).astype(dtype),
        "wqkv_language":   (0.05 * jax.random.normal(ks[3], (H, QKV_SIZE), jnp.float32)).astype(dtype),
        "wdense_vision":   (0.05 * jax.random.normal(ks[4], (H, H), jnp.float32)).astype(dtype),
        "wdense_language": (0.05 * jax.random.normal(ks[5], (H, H), jnp.float32)).astype(dtype),
    }

    out = vision_expert_attention(
        hidden_states, positions, vision_token_mask, params,
        num_heads=NUM_HEADS, num_kv_heads=NUM_KV_HEADS, head_dim=HEAD_DIM,
        tm_tokens=16, tn=128, tk=128, tq=16, tkv=16)   # small tiles: exercise all
                                                       # expert / causal branches
    jax.block_until_ready(out)
    assert out.shape == (T, H)

    ref = _reference(hidden_states, positions, vision_token_mask, params,
                     num_heads=NUM_HEADS, num_kv_heads=NUM_KV_HEADS, head_dim=HEAD_DIM)
    err = float(jnp.max(jnp.abs(out.astype(jnp.float32) - ref)))
    assert err < 0.1, f"max abs error too large: {err}"
    print("KERNEL_OK")
</pallas_src>

<mosaic_0001>
module attributes {stable_mosaic.version = 11 : i64} {
  func.func @_dual_expert_kernel(%arg0: i32, %arg1: i32, %arg2: i32, %arg3: memref<4xi32, #tpu.memory_space<smem>>, %arg4: memref<16x128xbf16, #tpu.memory_space<vmem>>, %arg5: memref<16x1xi32, #tpu.memory_space<vmem>>, %arg6: memref<128x128xbf16, #tpu.memory_space<vmem>>, %arg7: memref<128x128xbf16, #tpu.memory_space<vmem>>, %arg8: memref<1x128xbf16, #tpu.memory_space<vmem>>, %arg9: memref<16x128xbf16, #tpu.memory_space<vmem>>, %arg10: memref<16x128xf32, #tpu.memory_space<vmem>>, %arg11: memref<16x128xf32, #tpu.memory_space<vmem>>) attributes {dimension_semantics = [#tpu.dimension_semantics<parallel>, #tpu.dimension_semantics<parallel>, #tpu.dimension_semantics<arbitrary>], iteration_bounds = array<i64: 4, 4, 2>, scalar_prefetch = 1 : i64, scratch_operands = 2 : i64, tpu.core_type = #tpu.core_type<tc>, window_params = [{transform_indices = @transform_0, window_bounds = array<i64: 16, 128>}, {transform_indices = @transform_1, window_bounds = array<i64: 16, 1>}, {transform_indices = @transform_2, window_bounds = array<i64: 128, 128>}, {transform_indices = @transform_3, window_bounds = array<i64: 128, 128>}, {transform_indices = @transform_4, window_bounds = array<i64: 1, 128>}, {transform_indices = @transform_5, window_bounds = array<i64: 16, 128>}]} {
    %c0_i32 = arith.constant 0 : i32
    %0 = arith.cmpi eq, %arg2, %c0_i32 : i32
    %1 = arith.extui %0 : i1 to i32
    %c0_i32_0 = arith.constant 0 : i32
    %2 = arith.cmpi ne, %1, %c0_i32_0 : i32
    scf.if %2 {
      %cst = arith.constant 0.000000e+00 : f32
      %15 = vector.broadcast %cst : f32 to vector<16x128xf32>
      %c0_6 = arith.constant 0 : index
      %c0_7 = arith.constant 0 : index
      %16 = vector.load %arg10[%c0_6, %c0_7] : memref<16x128xf32, #tpu.memory_space<vmem>>, vector<16x128xf32>
      tpu.vector_store %arg10[%c0_6, %c0_7], %15 {strides = array<i32>} : memref<16x128xf32, #tpu.memory_space<vmem>>, vector<16x128xf32>,
      %cst_8 = arith.constant 0.000000e+00 : f32
      %17 = vector.broadcast %cst_8 : f32 to vector<16x128xf32>
      %c0_9 = arith.constant 0 : index
      %c0_10 = arith.constant 0 : index
      %18 = vector.load %arg11[%c0_9, %c0_10] : memref<16x128xf32, #tpu.memory_space<vmem>>, vector<16x128xf32>
      tpu.vector_store %arg11[%c0_9, %c0_10], %17 {strides = array<i32>} : memref<16x128xf32, #tpu.memory_space<vmem>>, vector<16x128xf32>,
    } else {
    }
    %c0 = arith.constant 0 : index
    %c0_1 = arith.constant 0 : index
    %3 = vector.load %arg4[%c0, %c0_1] : memref<16x128xbf16, #tpu.memory_space<vmem>>, vector<16x128xbf16>
    %4 = arith.index_cast %arg0 : i32 to index
    %5 = memref.load %arg3[%4] : memref<4xi32, #tpu.memory_space<smem>>
    %c0_i32_2 = arith.constant 0 : i32
    %6 = arith.cmpi sgt, %5, %c0_i32_2 : i32
    %7 = arith.extui %6 : i1 to i32
    %c0_i32_3 = arith.constant 0 : i32
    %8 = arith.cmpi ne, %7, %c0_i32_3 : i32
    scf.if %8 {
      %c0_6 = arith.constant 0 : index
      %c0_7 = arith.constant 0 : index
      %15 = vector.load %arg10[%c0_6, %c0_7] : memref<16x128xf32, #tpu.memory_space<vmem>>, vector<16x128xf32>
      %c0_8 = arith.constant 0 : index
      %c0_9 = arith.constant 0 : index
      %16 = vector.load %arg6[%c0_8, %c0_9] : memref<128x128xbf16, #tpu.memory_space<vmem>>, vector<128x128xbf16>
      %cst = arith.constant dense<0.000000e+00> : vector<16x128xf32>
      %17 = tpu.matmul %3, %16, %cst {dimension_numbers = #tpu.dot_dimension_numbers<[1], [0], [0], [1], [0, 0, 1, 1], [], []>} : vector<16x128xbf16>, vector<128x128xbf16>, vector<16x128xf32> -> vector<16x128xf32>
      %18 = arith.addf %15, %17 : vector<16x128xf32>
      %c0_10 = arith.constant 0 : index
      %c0_11 = arith.constant 0 : index
      %19 = vector.load %arg10[%c0_10, %c0_11] : memref<16x128xf32, #tpu.memory_space<vmem>>, vector<16x128xf32>
      tpu.vector_store %arg10[%c0_10, %c0_11], %18 {strides = array<i32>} : memref<16x128xf32, #tpu.memory_space<vmem>>, vector<16x128xf32>,
    } else {
    }
    %c16_i32 = arith.constant 16 : i32
    %9 = arith.cmpi slt, %5, %c16_i32 : i32
    %10 = arith.extui %9 : i1 to i32
    %c0_i32_4 = arith.constant 0 : i32
    %11 = arith.cmpi ne, %10, %c0_i32_4 : i32
    scf.if %11 {
      %c0_6 = arith.constant 0 : index
      %c0_7 = arith.constant 0 : index
      %15 = vector.load %arg11[%c0_6, %c0_7] : memref<16x128xf32, #tpu.memory_space<vmem>>, vector<16x128xf32>
      %c0_8 = arith.constant 0 : index
      %c0_9 = arith.constant 0 : index
      %16 = vector.load %arg7[%c0_8, %c0_9] : memref<128x128xbf16, #tpu.memory_space<vmem>>, vector<128x128xbf16>
      %cst = arith.constant dense<0.000000e+00> : vector<16x128xf32>
      %17 = tpu.matmul %3, %16, %cst {dimension_numbers = #tpu.dot_dimension_numbers<[1], [0], [0], [1], [0, 0, 1, 1], [], []>} : vector<16x128xbf16>, vector<128x128xbf16>, vector<16x128xf32> -> vector<16x128xf32>
      %18 = arith.addf %15, %17 : vector<16x128xf32>
      %c0_10 = arith.constant 0 : index
      %c0_11 = arith.constant 0 : index
      %19 = vector.load %arg11[%c0_10, %c0_11] : memref<16x128xf32, #tpu.memory_space<vmem>>, vector<16x128xf32>
      tpu.vector_store %arg11[%c0_10, %c0_11], %18 {strides = array<i32>} : memref<16x128xf32, #tpu.memory_space<vmem>>, vector<16x128xf32>,
    } else {
    }
    %c1_i32 = arith.constant 1 : i32
    %12 = arith.cmpi eq, %arg2, %c1_i32 : i32
    %13 = arith.extui %12 : i1 to i32
    %c0_i32_5 = arith.constant 0 : i32
    %14 = arith.cmpi ne, %13, %c0_i32_5 : i32
    scf.if %14 {
      %c0_6 = arith.constant 0 : index
      %c0_7 = arith.constant 0 : index
      %15 = vector.load %arg10[%c0_6, %c0_7] : memref<16x128xf32, #tpu.memory_space<vmem>>, vector<16x128xf32>
      %c0_8 = arith.constant 0 : index
      %c0_9 = arith.constant 0 : index
      %16 = vector.load %arg8[%c0_8, %c0_9] : memref<1x128xbf16, #tpu.memory_space<vmem>>, vector<1x128xbf16>
      %17 = arith.extf %16 : vector<1x128xbf16> to vector<1x128xf32>
      %18 = vector.broadcast %17 : vector<1x128xf32> to vector<16x128xf32>
      %19 = arith.addf %15, %18 : vector<16x128xf32>
      %c0_10 = arith.constant 0 : index
      %c0_11 = arith.constant 0 : index
      %20 = vector.load %arg5[%c0_10, %c0_11] : memref<16x1xi32, #tpu.memory_space<vmem>>, vector<16x1xi32>
      %c0_i32_12 = arith.constant 0 : i32
      %21 = vector.broadcast %c0_i32_12 : i32 to vector<16x1xi32>
      %22 = arith.cmpi ne, %20, %21 : vector<16x1xi32>
      %c0_13 = arith.constant 0 : index
      %c0_14 = arith.constant 0 : index
      %23 = vector.load %arg11[%c0_13, %c0_14] : memref<16x128xf32, #tpu.memory_space<vmem>>, vector<16x128xf32>
      %24 = vector.shape_cast %22 : vector<16x1xi1> to vector<16x1xi1>
      %25 = vector.broadcast %24 : vector<16x1xi1> to vector<16x128xi1>
      %26 = arith.select %25, %19, %23 : vector<16x128xi1>, vector<16x128xf32>
      %27 = arith.truncf %26 : vector<16x128xf32> to vector<16x128xbf16>
      %c0_15 = arith.constant 0 : index
      %c0_16 = arith.constant 0 : index
      %28 = vector.load %arg9[%c0_15, %c0_16] : memref<16x128xbf16, #tpu.memory_space<vmem>>, vector<16x128xbf16>
      tpu.vector_store %arg9[%c0_15, %c0_16], %27 {strides = array<i32>} : memref<16x128xbf16, #tpu.memory_space<vmem>>, vector<16x128xbf16>,
    } else {
    }
    return
  }
  func.func @transform_0(%arg0: i32, %arg1: i32, %arg2: i32, %arg3: memref<4xi32, #tpu.memory_space<smem>>) -> (i32, i32) {
    %c0_i32 = arith.constant 0 : i32
    return %arg0, %arg2 : i32, i32
  }
  func.func @transform_1(%arg0: i32, %arg1: i32, %arg2: i32, %arg3: memref<4xi32, #tpu.memory_space<smem>>) -> (i32, i32) {
    %c0_i32 = arith.constant 0 : i32
    %c0_i32_0 = arith.constant 0 : i32
    return %arg0, %c0_i32 : i32, i32
  }
  func.func @transform_2(%arg0: i32, %arg1: i32, %arg2: i32, %arg3: memref<4xi32, #tpu.memory_space<smem>>) -> (i32, i32) {
    %0 = arith.index_cast %arg0 : i32 to index
    %1 = memref.load %arg3[%0] : memref<4xi32, #tpu.memory_space<smem>>
    %c0_i32 = arith.constant 0 : i32
    %2 = arith.cmpi sgt, %1, %c0_i32 : i32
    %c0_i32_0 = arith.constant 0 : i32
    %3 = arith.select %2, %arg2, %c0_i32_0 : i32
    %c0_i32_1 = arith.constant 0 : i32
    return %3, %arg1 : i32, i32
  }
  func.func @transform_3(%arg0: i32, %arg1: i32, %arg2: i32, %arg3: memref<4xi32, #tpu.memory_space<smem>>) -> (i32, i32) {
    %0 = arith.index_cast %arg0 : i32 to index
    %1 = memref.load %arg3[%0] : memref<4xi32, #tpu.memory_space<smem>>
    %c16_i32 = arith.constant 16 : i32
    %2 = arith.cmpi slt, %1, %c16_i32 : i32
    %c0_i32 = arith.constant 0 : i32
    %3 = arith.select %2, %arg2, %c0_i32 : i32
    %c0_i32_0 = arith.constant 0 : i32
    return %3, %arg1 : i32, i32
  }
  func.func @transform_4(%arg0: i32, %arg1: i32, %arg2: i32, %arg3: memref<4xi32, #tpu.memory_space<smem>>) -> (i32, i32) {
    %c0_i32 = arith.constant 0 : i32
    %c0_i32_0 = arith.constant 0 : i32
    return %c0_i32, %arg1 : i32, i32
  }
  func.func @transform_5(%arg0: i32, %arg1: i32, %arg2: i32, %arg3: memref<4xi32, #tpu.memory_space<smem>>) -> (i32, i32) {
    %c0_i32 = arith.constant 0 : i32
    return %arg0, %arg1 : i32, i32
  }
}

</mosaic_0001>

<llo_original>
// kernel: tpu_custom_call.1
$region0: #{tpu_custom_call.1}
  #allocation0 [shape = 'u32[]', space=smem, size = 0x4, offset = 0x4, fixed_abs, tag = 'smem constant byte address 0x4 - core index']
  #allocation1 [shape = 'u32[72,128]{1,0:T(1,128)}', space=vmem, size = 0x9000, scoped, tag = 'internal scratch']
  #allocation2 [shape = 'f32[16,128]{1,0:T(8,128)}', space=vmem, size = 0x2000, scoped, tag = 'scratch operand']
  #allocation3 [shape = 'f32[16,128]{1,0:T(8,128)}', space=vmem, size = 0x2000, scoped, tag = 'scratch operand']
  #allocation4 [shape = 's32[1]{0}', space=sflag, size = 0x4, scoped, tag = 'scoped memory for tpu_custom_call.1']
  #allocation5 [shape = 'u8[512]{0}', space=smem, size = 0x200, scoped, tag = 'prefetched SMEM operand 0']
  %s0 = inlined_call_operand.vmem [shape: s32[4], index: 0, kind: input, shape index: {}]
  %s1 = inlined_call_operand.vmem [shape: bf16[64,256], index: 1, kind: input, shape index: {}]
  %s2 = inlined_call_operand.vmem [shape: s32[64,1], index: 2, kind: input, shape index: {}]
  %s3 = inlined_call_operand.hbm [shape: bf16[256,512], index: 3, kind: input, shape index: {}]
  %s4 = inlined_call_operand.hbm [shape: bf16[256,512], index: 4, kind: input, shape index: {}]
  %s5 = inlined_call_operand.hbm [shape: bf16[1,512], index: 5, kind: input, shape index: {}]
  %s6 = inlined_call_operand.hbm [shape: bf16[64,512], index: 6, kind: output, shape index: {}]
  %s7 = sld [smem:[#allocation0]]
  $region122: #{tpu_custom_call.1} parent=0
    _
  %s9 = ssub.s32 1, %s7
  %s10 = scalar_select 0, %s9, %s7
  %s12 = sshll.u32 %s0, 4
  %s13 = int_to_ptr.vmem [resolvable:$true] %s12
  %15 = dma.vmem_to_smem %s13, 16, [#allocation5], [#allocation4]
  %17 = dma.done [#allocation4], 16
  %18 = sfence
  $region1: #{tpu_custom_call.1} parent=0
    #allocation6 [shape = 'u8[8192]{0}', space=vmem, size = 0x2000, scoped, tag = 'input window, operand 1']
    #allocation7 [shape = 'u8[65536]{0}', space=vmem, size = 0x10000, scoped, tag = 'input window, operand 3']
    #allocation8 [shape = 's32[2]{0}', space=sflag, size = 0x8, scoped, tag = 'scoped memory for tpu_custom_call.1']
    #allocation9 [shape = 's32[2]{0}', space=sflag, size = 0x8, scoped, tag = 'scoped memory for tpu_custom_call.1']
    #allocation10 [shape = 'u8[65536]{0}', space=vmem, size = 0x10000, scoped, tag = 'input window, operand 4']
    #allocation11 [shape = 's32[2]{0}', space=sflag, size = 0x8, scoped, tag = 'scoped memory for tpu_custom_call.1']
    #allocation12 [shape = 'u8[1024]{0}', space=vmem, size = 0x400, scoped, tag = 'input window, operand 5']
    #allocation13 [shape = 'u8[8192]{0}', space=vmem, size = 0x2000, scoped, tag = 'output window, operand 0']
    %19 = vsyncpa [#allocation8], 0
    %s20 = scalar_lea.sflag [#allocation8], 1
    %21 = vsyncpa %s20, 0
    %22 = vsyncpa [#allocation11], 0
    %s23 = scalar_lea.sflag [#allocation11], 1
    %24 = vsyncpa %s23, 0
    %25 = vsyncpa [#allocation9], 0
    %s26 = scalar_lea.sflag [#allocation9], 1
    %27 = vsyncpa %s26, 0
    loop: start=0, step=1, limit=34
    $region2: #{tpu_custom_call.1} parent=1 // loop_pre_header
      _
    $region3: #{tpu_custom_call.1} parent=1 // loop_header
      %s29 = sphi 0, %s33
      %p30 = scmp.ge.s32.totalorder %s29, 34
      %s36 = sphi 0, %s55
      %s37 = sphi 0, %s51
      %s38 = sphi 0, %s47
      %s39 = sphi 0, %s36
      %s40 = sphi 0, %s37
      %s41 = sphi 0, %s38
      %s42 = sphi 0, %s39
      %s43 = sphi 0, %s40
      %s44 = sphi 0, %s41
      %s60 = sphi 0, %s62
      %s63 = sphi 0, %s60
      %s64 = sphi 0, %s63
      %s80 = sphi 0, %s64
      %s86 = sphi 0, %s88
      %s89 = sphi 0, %s86
      %s90 = sphi 0, %s89
      %s106 = sphi 0, %s90
      %s120 = sphi 0, %s122
      %s123 = sphi 0, %s120
      %s124 = sphi 0, %s123
      %s140 = sphi 0, %s124
      %s154 = sphi 0, %s156
      %s157 = sphi 0, %s154
      %s158 = sphi 0, %s157
      %s174 = sphi 0, %s158
      %s180 = sphi 0, %s182
      %s183 = sphi 0, %s180
      %s184 = sphi 0, %s183
      %s200 = sphi 0, %s184
      %s208 = sphi 0, %s210
      %s211 = sphi 0, %s208
      %s212 = sphi 0, %s211
      %s228 = sphi 0, %s212
    $region4: #{tpu_custom_call.1} parent=1 // loop_header_branch
      %32 = sbr.rel (%p30) target = $region8
    $region5: #{tpu_custom_call.1} parent=1 // loop_body
      %s34 = ssub.s32 %s29, 1
      %s35 = ssub.s32 %s29, 2
      %s45 = sadd.s32 1, %s38
      %p46 = scmp.ge.s32.totalorder %s45, 2
      %s47 = scalar_select %p46, 0, %s45
      %s48 = sadd.s32 1, %s37
      %s49 = scalar_select %p46, %s48, %s37
      %p50 = scmp.ge.s32.totalorder %s49, 4
      %s51 = scalar_select %p50, 0, %s49
      %s52 = sadd.s32 1, %s36
      %s53 = scalar_select %p50, %s52, %s36
      %p54 = scmp.ge.s32.totalorder %s53, 4
      %s55 = scalar_select %p54, 0, %s53
      %s56 = ssub.s32 %s36, %s55
      %s57 = ssub.s32 %s38, %s47
      %s58 = sor.u32 %s56, %s57
      %p59 = scmp.eq.s32.totalorder %s58, 0
      %s61 = sadd.s32 %s60, 1
      %s62 = scalar_select %p59, %s60, %s61
      %p65 = pneg %p59
      %p66 = scmp.eq.s32.totalorder %s29, 31
      %p67 = por %p65, %p66
      %p68 = scmp.ne.s32.totalorder %s60, %s63
      %p69 = scmp.eq.s32.totalorder %s29, 0
      %p70 = por %p68, %p69
      %p71 = scmp.ne.s32.totalorder %s60, %s63
      %p72 = scmp.eq.s32.totalorder %s34, 31
      %p73 = por %p71, %p72
      %p74 = scmp.ne.s32.totalorder %s63, %s64
      %p75 = scmp.eq.s32.totalorder %s34, 0
      %p76 = por %p74, %p75
      %p77 = scmp.ne.s32.totalorder %s63, %s64
      %p78 = scmp.eq.s32.totalorder %s35, 31
      %p79 = por %p77, %p78
      %p81 = scmp.ne.s32.totalorder %s64, %s80
      %p82 = scmp.eq.s32.totalorder %s35, 0
      %p83 = por %p81, %p82
      %s84 = ssub.s32 %s36, %s55
      %p85 = scmp.eq.s32.totalorder %s84, 0
      %s87 = sadd.s32 %s86, 1
      %s88 = scalar_select %p85, %s86, %s87
      %p91 = pneg %p85
      %p92 = scmp.eq.s32.totalorder %s29, 31
      %p93 = por %p91, %p92
      %p94 = scmp.ne.s32.totalorder %s86, %s89
      %p95 = scmp.eq.s32.totalorder %s29, 0
      %p96 = por %p94, %p95
      %p97 = scmp.ne.s32.totalorder %s86, %s89
      %p98 = scmp.eq.s32.totalorder %s34, 31
      %p99 = por %p97, %p98
      %p100 = scmp.ne.s32.totalorder %s89, %s90
      %p101 = scmp.eq.s32.totalorder %s34, 0
      %p102 = por %p100, %p101
      %p103 = scmp.ne.s32.totalorder %s89, %s90
      %p104 = scmp.eq.s32.totalorder %s35, 31
      %p105 = por %p103, %p104
      %p107 = scmp.ne.s32.totalorder %s90, %s106
      %p108 = scmp.eq.s32.totalorder %s35, 0
      %p109 = por %p107, %p108
      %s110 = sld [smem:[#allocation5 + %s36]]
      %p111 = scmp.gt.s32.totalorder %s110, 0
      %s112 = scalar_select %p111, %s38, 0
      %s113 = sld [smem:[#allocation5 + %s55]]
      %p114 = scmp.gt.s32.totalorder %s113, 0
      %s115 = scalar_select %p114, %s47, 0
      %s116 = ssub.s32 %s112, %s115
      %s117 = ssub.s32 %s37, %s51
      %s118 = sor.u32 %s116, %s117
      %p119 = scmp.eq.s32.totalorder %s118, 0
      %s121 = sadd.s32 %s120, 1
      %s122 = scalar_select %p119, %s120, %s121
      %p125 = pneg %p119
      %p126 = scmp.eq.s32.totalorder %s29, 31
      %p127 = por %p125, %p126
      %p128 = scmp.ne.s32.totalorder %s120, %s123
      %p129 = scmp.eq.s32.totalorder %s29, 0
      %p130 = por %p128, %p129
      %p131 = scmp.ne.s32.totalorder %s120, %s123
      %p132 = scmp.eq.s32.totalorder %s34, 31
      %p133 = por %p131, %p132
      %p134 = scmp.ne.s32.totalorder %s123, %s124
      %p135 = scmp.eq.s32.totalorder %s34, 0
      %p136 = por %p134, %p135
      %p137 = scmp.ne.s32.totalorder %s123, %s124
      %p138 = scmp.eq.s32.totalorder %s35, 31
      %p139 = por %p137, %p138
      %p141 = scmp.ne.s32.totalorder %s124, %s140
      %p142 = scmp.eq.s32.totalorder %s35, 0
      %p143 = por %p141, %p142
      %s144 = sld [smem:[#allocation5 + %s36]]
      %p145 = scmp.lt.s32.totalorder %s144, 16
      %s146 = scalar_select %p145, %s38, 0
      %s147 = sld [smem:[#allocation5 + %s55]]
      %p148 = scmp.lt.s32.totalorder %s147, 16
      %s149 = scalar_select %p148, %s47, 0
      %s150 = ssub.s32 %s146, %s149
      %s151 = ssub.s32 %s37, %s51
      %s152 = sor.u32 %s150, %s151
      %p153 = scmp.eq.s32.totalorder %s152, 0
      %s155 = sadd.s32 %s154, 1
      %s156 = scalar_select %p153, %s154, %s155
      %p159 = pneg %p153
      %p160 = scmp.eq.s32.totalorder %s29, 31
      %p161 = por %p159, %p160
      %p162 = scmp.ne.s32.totalorder %s154, %s157
      %p163 = scmp.eq.s32.totalorder %s29, 0
      %p164 = por %p162, %p163
      %p165 = scmp.ne.s32.totalorder %s154, %s157
      %p166 = scmp.eq.s32.totalorder %s34, 31
      %p167 = por %p165, %p166
      %p168 = scmp.ne.s32.totalorder %s157, %s158
      %p169 = scmp.eq.s32.totalorder %s34, 0
      %p170 = por %p168, %p169
      %p171 = scmp.ne.s32.totalorder %s157, %s158
      %p172 = scmp.eq.s32.totalorder %s35, 31
      %p173 = por %p171, %p172
      %p175 = scmp.ne.s32.totalorder %s158, %s174
      %p176 = scmp.eq.s32.totalorder %s35, 0
      %p177 = por %p175, %p176
      %s178 = ssub.s32 %s37, %s51
      %p179 = scmp.eq.s32.totalorder %s178, 0
      %s181 = sadd.s32 %s180, 1
      %s182 = scalar_select %p179, %s180, %s181
      %p185 = pneg %p179
      %p186 = scmp.eq.s32.totalorder %s29, 31
      %p187 = por %p185, %p186
      %p188 = scmp.ne.s32.totalorder %s180, %s183
      %p189 = scmp.eq.s32.totalorder %s29, 0
      %p190 = por %p188, %p189
      %p191 = scmp.ne.s32.totalorder %s180, %s183
      %p192 = scmp.eq.s32.totalorder %s34, 31
      %p193 = por %p191, %p192
      %p194 = scmp.ne.s32.totalorder %s183, %s184
      %p195 = scmp.eq.s32.totalorder %s34, 0
      %p196 = por %p194, %p195
      %p197 = scmp.ne.s32.totalorder %s183, %s184
      %p198 = scmp.eq.s32.totalorder %s35, 31
      %p199 = por %p197, %p198
      %p201 = scmp.ne.s32.totalorder %s184, %s200
      %p202 = scmp.eq.s32.totalorder %s35, 0
      %p203 = por %p201, %p202
      %s204 = ssub.s32 %s36, %s55
      %s205 = ssub.s32 %s37, %s51
      %s206 = sor.u32 %s204, %s205
      %p207 = scmp.eq.s32.totalorder %s206, 0
      %s209 = sadd.s32 %s208, 1
      %s210 = scalar_select %p207, %s208, %s209
      %p213 = pneg %p207
      %p214 = scmp.eq.s32.totalorder %s29, 31
      %p215 = por %p213, %p214
      %p216 = scmp.ne.s32.totalorder %s208, %s211
      %p217 = scmp.eq.s32.totalorder %s29, 0
      %p218 = por %p216, %p217
      %p219 = scmp.ne.s32.totalorder %s208, %s211
      %p220 = scmp.eq.s32.totalorder %s34, 31
      %p221 = por %p219, %p220
      %p222 = scmp.ne.s32.totalorder %s211, %s212
      %p223 = scmp.eq.s32.totalorder %s34, 0
      %p224 = por %p222, %p223
      %p225 = scmp.ne.s32.totalorder %s211, %s212
      %p226 = scmp.eq.s32.totalorder %s35, 31
      %p227 = por %p225, %p226
      %p229 = scmp.ne.s32.totalorder %s212, %s228
      %p230 = scmp.eq.s32.totalorder %s35, 0
      %p231 = por %p229, %p230
      %p232 = scmp.le.s32.totalorder 1, %s29
      %p233 = scmp.lt.s32.totalorder %s29, 33
      %p234 = pnand %p232, %p233
      %p235 = pneg %p234
      // Predicated region
      $region9: #{tpu_custom_call.1} parent=5 // pred_check
        _
      $region10: #{tpu_custom_call.1} parent=5 // pred_check_branch
        %237 = sbr.rel (%p234) target = $region12
      $region11: #{tpu_custom_call.1} parent=5 // pred_region
        %s238 = ssub.s32 %s29, 1
      $region12: #{tpu_custom_call.1} parent=5 // pred_fallthru
        _
      %p239 = scmp.lt.s32.totalorder %s29, 32
      // Predicated region
      $region13: #{tpu_custom_call.1} parent=5 // pred_check
        %p240 = pneg %p239
      $region14: #{tpu_custom_call.1} parent=5 // pred_check_branch
        %242 = sbr.rel (%p240) target = $region16
      $region15: #{tpu_custom_call.1} parent=5 // pred_region
        // Predicated region
        $region17: #{tpu_custom_call.1} parent=15 // pred_check
          %p243 = pneg %p70
        $region18: #{tpu_custom_call.1} parent=15 // pred_check_branch
          %245 = sbr.rel (%p243) target = $region20
        $region19: #{tpu_custom_call.1} parent=15 // pred_region
          %s246 = sand.u32 %s60, 1
          %s247 = sand.u32 %s60, 1
          %s248 = smul.addr %s247, 8
          %s249 = scalar_lea.vmem [#allocation6], %s248
          %s250 = smul.u32 2, %s36
          %s251 = smul.addr %s250, 2
          %s252 = sadd.s32 %s38, %s251
          %s253 = smul.addr %s252, 4
          %s254 = scalar_lea.vmem %s1, %s253
          // Predicated region
          $region21: #{tpu_custom_call.1} parent=19 // pred_check
            _
          $region22: #{tpu_custom_call.1} parent=19 // pred_check_branch
            %256 = sbr.rel (0) target = $region24
          $region23: #{tpu_custom_call.1} parent=19 // pred_region
            // Predicated region
            $region25: #{tpu_custom_call.1} parent=23 // pred_check
              _
            $region26: #{tpu_custom_call.1} parent=23 // pred_check_branch
              %258 = sbr.rel target = $region28
            $region27: #{tpu_custom_call.1} parent=23 // pred_region
              // Predicated region
              $region40: #{tpu_custom_call.1} parent=27 // pred_check
                _
              $region41: #{tpu_custom_call.1} parent=27 // pred_check_branch
                %276 = sbr.rel (0) target = $region43
              $region42: #{tpu_custom_call.1} parent=27 // pred_region
                loop: start=0, step=1, limit=1
                $region44: #{tpu_custom_call.1} parent=42 // loop_pre_header
                  _
                $region45: #{tpu_custom_call.1} parent=42 // loop_header
                  %s278 = sphi 0, %s282
                  %p279 = scmp.ge.s32.totalorder %s278, 1
                  %s283 = sphi %s254, %s254
                  %s284 = sphi %s249, %s249
                $region46: #{tpu_custom_call.1} parent=42 // loop_header_branch
                  %281 = sbr.rel (%p279) target = $region50
                $region47: #{tpu_custom_call.1} parent=42 // loop_body
                  _
                $region48: #{tpu_custom_call.1} parent=42 // loop_footer
                  %s282 = sadd.s32 1, %s278
                $region49: #{tpu_custom_call.1} parent=42 // loop_footer_branch
                  %277 = sbr.rel target = $region45
                $region50: #{tpu_custom_call.1} parent=42 // loop_exit
                  _
                %s286 = ssub.s32 16, 1
                loop: start=0, step=1, limit=1
                $region51: #{tpu_custom_call.1} parent=42 // loop_pre_header
                  _
                $region52: #{tpu_custom_call.1} parent=42 // loop_header
                  %s288 = sphi 0, %s292
                  %p289 = scmp.ge.s32.totalorder %s288, 1
                  %s293 = sphi %s254, %s254
                  %s294 = sphi %s249, %s249
                $region53: #{tpu_custom_call.1} parent=42 // loop_header_branch
                  %291 = sbr.rel (%p289) target = $region57
                $region54: #{tpu_custom_call.1} parent=42 // loop_body
                  %v295 = vld [vmem:[%s293] sm:%s286]
                  %296 = vst [vmem:[%s294] sm:%s286] %v295
                  %v297 = vld [vmem:[%s293 + $0x8] sm:%s286]
                  %298 = vst [vmem:[%s294 + $0x4] sm:%s286] %v297
                $region55: #{tpu_custom_call.1} parent=42 // loop_footer
                  %s292 = sadd.s32 1, %s288
                $region56: #{tpu_custom_call.1} parent=42 // loop_footer_branch
                  %287 = sbr.rel target = $region52
                $region57: #{tpu_custom_call.1} parent=42 // loop_exit
                  _
              $region43: #{tpu_custom_call.1} parent=27 // pred_fallthru
                _
            $region28: #{tpu_custom_call.1} parent=23 // pred_fallthru
              _
            // Predicated region
            $region29: #{tpu_custom_call.1} parent=23 // pred_check
              _
            $region30: #{tpu_custom_call.1} parent=23 // pred_check_branch
              %260 = sbr.rel (0) target = $region32
            $region31: #{tpu_custom_call.1} parent=23 // pred_region
              %s262 = ssub.s32 16, 1
              loop: start=0, step=1, limit=1
              $region33: #{tpu_custom_call.1} parent=31 // loop_pre_header
                _
              $region34: #{tpu_custom_call.1} parent=31 // loop_header
                %s264 = sphi 0, %s268
                %p265 = scmp.ge.s32.totalorder %s264, 1
                %s269 = sphi %s254, %s254
                %s270 = sphi %s249, %s249
              $region35: #{tpu_custom_call.1} parent=31 // loop_header_branch
                %267 = sbr.rel (%p265) target = $region39
              $region36: #{tpu_custom_call.1} parent=31 // loop_body
                %v271 = vld [vmem:[%s269] sm:%s262]
                %272 = vst [vmem:[%s270] sm:%s262] %v271
                %v273 = vld [vmem:[%s269 + $0x8] sm:%s262]
                %274 = vst [vmem:[%s270 + $0x4] sm:%s262] %v273
              $region37: #{tpu_custom_call.1} parent=31 // loop_footer
                %s268 = sadd.s32 1, %s264
              $region38: #{tpu_custom_call.1} parent=31 // loop_footer_branch
                %263 = sbr.rel target = $region34
              $region39: #{tpu_custom_call.1} parent=31 // loop_exit
                _
            $region32: #{tpu_custom_call.1} parent=23 // pred_fallthru
              _
          $region24: #{tpu_custom_call.1} parent=19 // pred_fallthru
            _
          %299 = vnop
        $region20: #{tpu_custom_call.1} parent=15 // pred_fallthru
          _
        // Predicated region
        $region58: #{tpu_custom_call.1} parent=15 // pred_check
          %p300 = pneg %p96
        $region59: #{tpu_custom_call.1} parent=15 // pred_check_branch
          %302 = sbr.rel (%p300) target = $region61
        $region60: #{tpu_custom_call.1} parent=15 // pred_region
          %s303 = smul.u32 2, %s36
          %p304 = scmp.lt.s32.totalorder %s303, 7
          %s305 = scalar_select %p304, %s303, 7
          %s306 = smul.addr %s305, 8
          %s307 = scalar_lea.vmem %s2, %s306
          %s308 = smul.u32 2, %s36
        $region61: #{tpu_custom_call.1} parent=15 // pred_fallthru
          _
        // Predicated region
        $region62: #{tpu_custom_call.1} parent=15 // pred_check
          %p309 = pneg %p130
        $region63: #{tpu_custom_call.1} parent=15 // pred_check_branch
          %311 = sbr.rel (%p309) target = $region65
        $region64: #{tpu_custom_call.1} parent=15 // pred_region
          %s312 = sand.u32 %s120, 1
          %s313 = scalar_lea.sflag [#allocation8], %s312
          %s314 = sand.u32 %s120, 1
          %s315 = smul.addr %s314, 64
          %s316 = scalar_lea.vmem [#allocation7], %s315
          %s317 = sld [smem:[#allocation5 + %s36]]
          %p318 = scmp.gt.s32.totalorder %s317, 0
          %s319 = scalar_select %p318, %s38, 0
          %s320 = smul.u32 16, %s319
          %322 = vsyncadd %s313, 0
          %s323 = smul.addr %s320, 4
          %s324 = sadd.s32 %s37, %s323
          %s325 = smul.addr %s324, 4
          %s326 = scalar_lea.hbm %s3, %s325
          %s327 = sshll.u32 %s326, 4
          %s328 = int_to_ptr.hbm [resolvable:$true] %s327
          %s329 = sshll.u32 %s316, 4
          %s330 = int_to_ptr.vmem [resolvable:$true] %s329
          %335 = dma.hbm_to_vmem [thread:$0]  %s328, 1024, %s330, %s313, 256, 64, 4
        $region65: #{tpu_custom_call.1} parent=15 // pred_fallthru
          _
        // Predicated region
        $region66: #{tpu_custom_call.1} parent=15 // pred_check
          %p336 = pneg %p164
        $region67: #{tpu_custom_call.1} parent=15 // pred_check_branch
          %338 = sbr.rel (%p336) target = $region69
        $region68: #{tpu_custom_call.1} parent=15 // pred_region
          %s339 = sand.u32 %s29, 1
          %s340 = scalar_lea.sflag [#allocation11], %s339
          %s341 = sand.u32 %s154, 1
          %s342 = smul.addr %s341, 64
          %s343 = scalar_lea.vmem [#allocation10], %s342
          %s344 = sld [smem:[#allocation5 + %s36]]
          %p345 = scmp.lt.s32.totalorder %s344, 16
          %s346 = scalar_select %p345, %s38, 0
          %s347 = smul.u32 16, %s346
          %349 = vsyncadd %s340, 0
          %s350 = smul.addr %s347, 4
          %s351 = sadd.s32 %s37, %s350
          %s352 = smul.addr %s351, 4
          %s353 = scalar_lea.hbm %s4, %s352
          %s354 = sshll.u32 %s353, 4
          %s355 = int_to_ptr.hbm [resolvable:$true] %s354
          %s356 = sshll.u32 %s343, 4
          %s357 = int_to_ptr.vmem [resolvable:$true] %s356
          %362 = dma.hbm_to_vmem [thread:$0]  %s355, 1024, %s357, %s340, 256, 64, 4
        $region69: #{tpu_custom_call.1} parent=15 // pred_fallthru
          _
        // Predicated region
        $region70: #{tpu_custom_call.1} parent=15 // pred_check
          %p363 = pneg %p190
        $region71: #{tpu_custom_call.1} parent=15 // pred_check_branch
          %365 = sbr.rel (%p363) target = $region73
        $region72: #{tpu_custom_call.1} parent=15 // pred_region
          %s366 = sand.u32 %s29, 1
          %s367 = scalar_lea.sflag [#allocation11], %s366
          %s368 = sand.u32 %s180, 1
          %s369 = scalar_lea.vmem [#allocation12], %s368
          %371 = vsyncadd %s367, 0
          %s372 = scalar_lea.hbm %s5, %s37
          %s374 = sshll.u32 %s372, 4
          %s375 = int_to_ptr.hbm [resolvable:$true] %s374
          %s376 = sshll.u32 %s369, 4
          %s377 = int_to_ptr.vmem [resolvable:$true] %s376
          %379 = dma.hbm_to_vmem [thread:$0]  %s375, 16, %s377, %s367
        $region73: #{tpu_custom_call.1} parent=15 // pred_fallthru
          _
      $region16: #{tpu_custom_call.1} parent=5 // pred_fallthru
        _
      %p380 = scmp.le.s32.totalorder 1, %s29
      %p381 = scmp.lt.s32.totalorder %s29, 33
      %p382 = pnand %p380, %p381
      %p383 = pneg %p382
      // Predicated region
      $region74: #{tpu_custom_call.1} parent=5 // pred_check
        _
      $region75: #{tpu_custom_call.1} parent=5 // pred_check_branch
        %385 = sbr.rel (%p382) target = $region77
      $region76: #{tpu_custom_call.1} parent=5 // pred_region
        %s386 = ssub.s32 %s29, 1
        %s387 = sand.u32 %s63, 1
        %s388 = sand.u32 %s63, 1
        %s389 = smul.addr %s388, 8
        %s390 = scalar_lea.vmem [#allocation6], %s389
        // Predicated region
        $region78: #{tpu_custom_call.1} parent=76 // pred_check
          %p391 = pneg %p76
        $region79: #{tpu_custom_call.1} parent=76 // pred_check_branch
          %393 = sbr.rel (%p391) target = $region81
        $region80: #{tpu_custom_call.1} parent=76 // pred_region
          _
        $region81: #{tpu_custom_call.1} parent=76 // pred_fallthru
          _
        %s394 = sand.u32 %s123, 1
        %s395 = scalar_lea.sflag [#allocation8], %s394
        %s396 = sand.u32 %s123, 1
        %s397 = smul.addr %s396, 64
        %s398 = scalar_lea.vmem [#allocation7], %s397
        // Predicated region
        $region82: #{tpu_custom_call.1} parent=76 // pred_check
          %p399 = pneg %p136
        $region83: #{tpu_custom_call.1} parent=76 // pred_check_branch
          %401 = sbr.rel (%p399) target = $region85
        $region84: #{tpu_custom_call.1} parent=76 // pred_region
          %403 = dma.done %s395, 1024
        $region85: #{tpu_custom_call.1} parent=76 // pred_fallthru
          _
        %s404 = sand.u32 %s34, 1
        %s405 = scalar_lea.sflag [#allocation11], %s404
        %s406 = sand.u32 %s157, 1
        %s407 = smul.addr %s406, 64
        %s408 = scalar_lea.vmem [#allocation10], %s407
        // Predicated region
        $region86: #{tpu_custom_call.1} parent=76 // pred_check
          %p409 = pneg %p170
        $region87: #{tpu_custom_call.1} parent=76 // pred_check_branch
          %411 = sbr.rel (%p409) target = $region89
        $region88: #{tpu_custom_call.1} parent=76 // pred_region
          %413 = dma.done %s405, 1024
        $region89: #{tpu_custom_call.1} parent=76 // pred_fallthru
          _
        %s414 = sand.u32 %s34, 1
        %s415 = scalar_lea.sflag [#allocation11], %s414
        %s416 = sand.u32 %s183, 1
        %s417 = scalar_lea.vmem [#allocation12], %s416
        // Predicated region
        $region90: #{tpu_custom_call.1} parent=76 // pred_check
          %p418 = pneg %p196
        $region91: #{tpu_custom_call.1} parent=76 // pred_check_branch
          %420 = sbr.rel (%p418) target = $region93
        $region92: #{tpu_custom_call.1} parent=76 // pred_region
          %422 = dma.done %s415, 16
        $region93: #{tpu_custom_call.1} parent=76 // pred_fallthru
          _
        %s423 = sand.u32 %s63, 1
        %s424 = sand.u32 %s63, 1
        %s425 = smul.addr %s424, 8
        %s426 = scalar_lea.vmem [#allocation6], %s425
        %p427 = pneg %p76
        %p428 = pneg %p73
        %s429 = smul.u32 2, %s39
        %p430 = scmp.lt.s32.totalorder %s429, 7
        %s431 = scalar_select %p430, %s429, 7
        %s432 = smul.addr %s431, 8
        %s433 = scalar_lea.vmem %s2, %s432
        %p434 = pneg %p102
        %p435 = pneg %p99
        %s436 = sand.u32 %s123, 1
        %s437 = scalar_lea.sflag [#allocation8], %s436
        %s438 = sand.u32 %s123, 1
        %s439 = smul.addr %s438, 64
        %s440 = scalar_lea.vmem [#allocation7], %s439
        %p441 = pneg %p136
        %p442 = pneg %p133
        %s443 = sand.u32 %s34, 1
        %s444 = scalar_lea.sflag [#allocation11], %s443
        %s445 = sand.u32 %s157, 1
        %s446 = smul.addr %s445, 64
        %s447 = scalar_lea.vmem [#allocation10], %s446
        %p448 = pneg %p170
        %p449 = pneg %p167
        %s450 = sand.u32 %s34, 1
        %s451 = scalar_lea.sflag [#allocation11], %s450
        %s452 = sand.u32 %s183, 1
        %s453 = scalar_lea.vmem [#allocation12], %s452
        %p454 = pneg %p196
        %p455 = pneg %p193
        %p456 = pneg %p224
        %p457 = pneg %p221
        %s458 = sand.u32 %s211, 1
        %s459 = scalar_lea.sflag [#allocation9], %s458
        %s460 = sand.u32 %s211, 1
        %s461 = smul.addr %s460, 8
        %s462 = scalar_lea.vmem [#allocation13], %s461
        %s463 = smul.u32 2, %s39
        %s464 = smul.u32 2, %s39
        %p465 = scmp.lt.s32.totalorder %s464, 7
        %s466 = scalar_select %p465, %s464, 7
        %s467 = smul.addr %s466, 8
        %s468 = scalar_lea.vmem %s2, %s467
        %s469 = smul.u32 2, %s39
        %s470 = sld [smem:[#allocation5 + %s39]]
        %p471 = scmp.gt.s32.totalorder %s470, 0
        %s472 = scalar_select %p471, %s41, 0
        %s473 = smul.u32 16, %s472
        %s474 = sld [smem:[#allocation5 + %s39]]
        %p475 = scmp.lt.s32.totalorder %s474, 16
        %s476 = scalar_select %p475, %s41, 0
        %s477 = smul.u32 16, %s476
        %s478 = smul.u32 2, %s39
        %p479 = scmp.eq.s32.totalorder %s41, 0
        // Predicated region
        $region94: #{tpu_custom_call.1} parent=76 // pred_check
          %p480 = pneg %p479
        $region95: #{tpu_custom_call.1} parent=76 // pred_check_branch
          %482 = sbr.rel (%p480) target = $region97
        $region96: #{tpu_custom_call.1} parent=76 // pred_region
          %483 = vst [vmem:[#allocation2] sm:$0xff] 0.0
          %484 = vst [vmem:[#allocation2 + $0x8] sm:$0xff] 0.0
          %485 = vst [vmem:[#allocation3] sm:$0xff] 0.0
          %486 = vst [vmem:[#allocation3 + $0x8] sm:$0xff] 0.0
        $region97: #{tpu_custom_call.1} parent=76 // pred_fallthru
          _
        %v487 = vld [vmem:[%s390] sm:$0xf]
        %v488 = vld [vmem:[%s390 + $0x4] sm:$0xf]
        %s489 = sld [smem:[#allocation5 + %s39]]
        %p490 = scmp.gt.s32.totalorder %s489, 0
        // Predicated region
        $region98: #{tpu_custom_call.1} parent=76 // pred_check
          %p491 = pneg %p490
        $region99: #{tpu_custom_call.1} parent=76 // pred_check_branch
          %493 = sbr.rel (%p491) target = $region101
        $region100: #{tpu_custom_call.1} parent=76 // pred_region
          %v494 = vld [vmem:[#allocation2] sm:$0xff]
          %v495 = vld [vmem:[#allocation2 + $0x8] sm:$0xff]
          %v496 = vld [vmem:[%s398] sm:$0xf]
          %v497 = vld [vmem:[%s398 + $0x4] sm:$0xf]
          %v498 = vld [vmem:[%s398 + $0x8] sm:$0xf]
          %v499 = vld [vmem:[%s398 + $0xc] sm:$0xf]
          %v500 = vld [vmem:[%s398 + $0x10] sm:$0xf]
          %v501 = vld [vmem:[%s398 + $0x14] sm:$0xf]
          %v502 = vld [vmem:[%s398 + $0x18] sm:$0xf]
          %v503 = vld [vmem:[%s398 + $0x1c] sm:$0xf]
          %v504 = vld [vmem:[%s398 + $0x20] sm:$0xf]
          %v505 = vld [vmem:[%s398 + $0x24] sm:$0xf]
          %v506 = vld [vmem:[%s398 + $0x28] sm:$0xf]
          %v507 = vld [vmem:[%s398 + $0x2c] sm:$0xf]
          %v508 = vld [vmem:[%s398 + $0x30] sm:$0xf]
          %v509 = vld [vmem:[%s398 + $0x34] sm:$0xf]
          %v510 = vld [vmem:[%s398 + $0x38] sm:$0xf]
          %v511 = vld [vmem:[%s398 + $0x3c] sm:$0xf]
          %v514 = vunpack.c.l.b16 %v487
          %v515 = vunpack.c.l.b16 %v488
          %v516 = vpack.c.b16 %v515, %v514
          %v534 = vunpack.c.l.b16 %v496
          %v535 = vunpack.c.l.b16 %v497
          %v536 = vunpack.c.l.b16 %v498
          %v537 = vunpack.c.l.b16 %v499
          %v538 = vunpack.c.l.b16 %v500
          %v539 = vunpack.c.l.b16 %v501
          %v540 = vunpack.c.l.b16 %v502
          %v541 = vunpack.c.l.b16 %v503
          %v542 = vunpack.c.l.b16 %v504
          %v543 = vunpack.c.l.b16 %v505
          %v544 = vunpack.c.l.b16 %v506
          %v545 = vunpack.c.l.b16 %v507
          %v546 = vunpack.c.l.b16 %v508
          %v547 = vunpack.c.l.b16 %v509
          %v548 = vunpack.c.l.b16 %v510
          %v549 = vunpack.c.l.b16 %v511
          %v550 = vpack.c.b16 %v535, %v534
          %v551 = vpack.c.b16 %v537, %v536
          %v552 = vpack.c.b16 %v539, %v538
          %v553 = vpack.c.b16 %v541, %v540
          %v554 = vpack.c.b16 %v543, %v542
          %v555 = vpack.c.b16 %v545, %v544
          %v556 = vpack.c.b16 %v547, %v546
          %v557 = vpack.c.b16 %v549, %v548
          %566 = vmatpush.bf16.msra.mxu0 %v557
          %567 = vmatpush.bf16.msra.mxu0 %v556
          %568 = vmatpush.bf16.msra.mxu0 %v555
          %569 = vmatpush.bf16.msra.mxu0 %v554
          %570 = vmatpush.bf16.msra.mxu0 %v553
          %571 = vmatpush.bf16.msra.mxu0 %v552
          %572 = vmatpush.bf16.msra.mxu0 %v551
          %573 = vmatpush.bf16.msra.mxu0 %v550
          %574 = vmatmul.bf16.gmra.mxu0 %v516
          %v575 = vpop.f32.mrf.mxu0
          %v576 = vadd.f32 0.0, %v575
          %v577 = vpop.f32.mrf.mxu0
          %v578 = vadd.f32 0.0, %v577
          %579 = vdwg.mxu0
          %v580 = vadd.f32 %v494, %v576
          %v581 = vadd.f32 %v495, %v578
          %582 = vst [vmem:[#allocation2] sm:$0xff] %v580
          %583 = vst [vmem:[#allocation2 + $0x8] sm:$0xff] %v581
        $region101: #{tpu_custom_call.1} parent=76 // pred_fallthru
          _
        %p584 = scmp.lt.s32.totalorder %s489, 16
        // Predicated region
        $region102: #{tpu_custom_call.1} parent=76 // pred_check
          %p585 = pneg %p584
        $region103: #{tpu_custom_call.1} parent=76 // pred_check_branch
          %587 = sbr.rel (%p585) target = $region105
        $region104: #{tpu_custom_call.1} parent=76 // pred_region
          %v588 = vld [vmem:[#allocation3] sm:$0xff]
          %v589 = vld [vmem:[#allocation3 + $0x8] sm:$0xff]
          %v590 = vld [vmem:[%s408] sm:$0xf]
          %v591 = vld [vmem:[%s408 + $0x4] sm:$0xf]
          %v592 = vld [vmem:[%s408 + $0x8] sm:$0xf]
          %v593 = vld [vmem:[%s408 + $0xc] sm:$0xf]
          %v594 = vld [vmem:[%s408 + $0x10] sm:$0xf]
          %v595 = vld [vmem:[%s408 + $0x14] sm:$0xf]
          %v596 = vld [vmem:[%s408 + $0x18] sm:$0xf]
          %v597 = vld [vmem:[%s408 + $0x1c] sm:$0xf]
          %v598 = vld [vmem:[%s408 + $0x20] sm:$0xf]
          %v599 = vld [vmem:[%s408 + $0x24] sm:$0xf]
          %v600 = vld [vmem:[%s408 + $0x28] sm:$0xf]
          %v601 = vld [vmem:[%s408 + $0x2c] sm:$0xf]
          %v602 = vld [vmem:[%s408 + $0x30] sm:$0xf]
          %v603 = vld [vmem:[%s408 + $0x34] sm:$0xf]
          %v604 = vld [vmem:[%s408 + $0x38] sm:$0xf]
          %v605 = vld [vmem:[%s408 + $0x3c] sm:$0xf]
          %v608 = vunpack.c.l.b16 %v487
          %v609 = vunpack.c.l.b16 %v488
          %v610 = vpack.c.b16 %v609, %v608
          %v628 = vunpack.c.l.b16 %v590
          %v629 = vunpack.c.l.b16 %v591
          %v630 = vunpack.c.l.b16 %v592
          %v631 = vunpack.c.l.b16 %v593
          %v632 = vunpack.c.l.b16 %v594
          %v633 = vunpack.c.l.b16 %v595
          %v634 = vunpack.c.l.b16 %v596
          %v635 = vunpack.c.l.b16 %v597
          %v636 = vunpack.c.l.b16 %v598
          %v637 = vunpack.c.l.b16 %v599
          %v638 = vunpack.c.l.b16 %v600
          %v639 = vunpack.c.l.b16 %v601
          %v640 = vunpack.c.l.b16 %v602
          %v641 = vunpack.c.l.b16 %v603
          %v642 = vunpack.c.l.b16 %v604
          %v643 = vunpack.c.l.b16 %v605
          %v644 = vpack.c.b16 %v629, %v628
          %v645 = vpack.c.b16 %v631, %v630
          %v646 = vpack.c.b16 %v633, %v632
          %v647 = vpack.c.b16 %v635, %v634
          %v648 = vpack.c.b16 %v637, %v636
          %v649 = vpack.c.b16 %v639, %v638
          %v650 = vpack.c.b16 %v641, %v640
          %v651 = vpack.c.b16 %v643, %v642
          %660 = vmatpush.bf16.msra.mxu0 %v651
          %661 = vmatpush.bf16.msra.mxu0 %v650
          %662 = vmatpush.bf16.msra.mxu0 %v649
          %663 = vmatpush.bf16.msra.mxu0 %v648
          %664 = vmatpush.bf16.msra.mxu0 %v647
          %665 = vmatpush.bf16.msra.mxu0 %v646
          %666 = vmatpush.bf16.msra.mxu0 %v645
          %667 = vmatpush.bf16.msra.mxu0 %v644
          %668 = vmatmul.bf16.gmra.mxu0 %v610
          %v669 = vpop.f32.mrf.mxu0
          %v670 = vadd.f32 0.0, %v669
          %v671 = vpop.f32.mrf.mxu0
          %v672 = vadd.f32 0.0, %v671
          %673 = vdwg.mxu0
          %v674 = vadd.f32 %v588, %v670
          %v675 = vadd.f32 %v589, %v672
          %676 = vst [vmem:[#allocation3] sm:$0xff] %v674
          %677 = vst [vmem:[#allocation3 + $0x8] sm:$0xff] %v675
        $region105: #{tpu_custom_call.1} parent=76 // pred_fallthru
          _
        %p678 = scmp.eq.s32.totalorder %s41, 1
        // Predicated region
        $region106: #{tpu_custom_call.1} parent=76 // pred_check
          %p679 = pneg %p678
        $region107: #{tpu_custom_call.1} parent=76 // pred_check_branch
          %681 = sbr.rel (%p679) target = $region109
        $region108: #{tpu_custom_call.1} parent=76 // pred_region
          %v682 = vld [vmem:[#allocation2] sm:$0xff]
          %v683 = vld [vmem:[#allocation2 + $0x8] sm:$0xff]
          %v684 = vld [vmem:[%s417] sm:$0x1]
          %v685 = vunpack.c.l.bf16 %v684
          %v686 = vperm.slane %v685, 0
          %v687 = vadd.f32 %v682, %v686
          %v688 = vadd.f32 %v683, %v686
          %v689 = vld [vmem:[%s468] sm:$0xff]
          %v690 = vld [vmem:[%s468 + $0x8] sm:$0xff]
          %vm691 = vcmp.ne.s32.totalorder %v689, 0
          %vm692 = vcmp.ne.s32.totalorder %v690, 0
          %v693 = vld [vmem:[#allocation3] sm:$0xff]
          %v694 = vld [vmem:[#allocation3 + $0x8] sm:$0xff]
          %v695 = vsel %vm691, 1, 0
          %v696 = vsel %vm692, 1, 0
          %697 = vset.pattern.permute.xlu0 0
          %698 = vperm.xlu0 %697, %v695
          %v699 = vpop.permute.xlu0 %698
          %700 = vset.pattern.permute.xlu0 0
          %701 = vperm.xlu0 %700, %v696
          %v702 = vpop.permute.xlu0 %701
          %vm703 = vcmp.eq.s32.totalorder %v699, 1
          %vm704 = vcmp.eq.s32.totalorder %v702, 1
          %v705 = vsel %vm703, %v687, %v693
          %v706 = vsel %vm704, %v688, %v694
          %v707 = vpack.c.bf16 %v705, %v705
          %v708 = vpack.c.bf16 %v706, %v706
          %709 = vst [vmem:[%s462] sm:$0xf] %v707
          %710 = vst [vmem:[%s462 + $0x4] sm:$0xf] %v708
        $region109: #{tpu_custom_call.1} parent=76 // pred_fallthru
          _
        %s711 = sand.u32 %s211, 1
        %s712 = scalar_lea.sflag [#allocation9], %s711
        %s713 = sand.u32 %s211, 1
        %s714 = smul.addr %s713, 8
        %s715 = scalar_lea.vmem [#allocation13], %s714
        // Predicated region
        $region110: #{tpu_custom_call.1} parent=76 // pred_check
          %p716 = pneg %p221
        $region111: #{tpu_custom_call.1} parent=76 // pred_check_branch
          %718 = sbr.rel (%p716) target = $region113
        $region112: #{tpu_custom_call.1} parent=76 // pred_region
          %s719 = smul.u32 2, %s39
          %721 = vsyncadd %s712, 0
          %s722 = smul.addr %s719, 4
          %s723 = sadd.s32 %s40, %s722
          %s724 = smul.addr %s723, 4
          %s725 = scalar_lea.hbm %s6, %s724
          %s726 = sshll.u32 %s715, 4
          %s727 = int_to_ptr.vmem [resolvable:$true] %s726
          %s728 = sshll.u32 %s725, 4
          %s729 = int_to_ptr.hbm [resolvable:$true] %s728
          %734 = dma.vmem_to_hbm [thread:$0]  %s727, 128, %s729, %s712, 64, 256, 4
        $region113: #{tpu_custom_call.1} parent=76 // pred_fallthru
          _
      $region77: #{tpu_custom_call.1} parent=5 // pred_fallthru
        _
      %p735 = scmp.le.s32.totalorder 2, %s29
      // Predicated region
      $region114: #{tpu_custom_call.1} parent=5 // pred_check
        %p736 = pneg %p735
      $region115: #{tpu_custom_call.1} parent=5 // pred_check_branch
        %738 = sbr.rel (%p736) target = $region117
      $region116: #{tpu_custom_call.1} parent=5 // pred_region
        %s739 = ssub.s32 %s29, 2
        // Predicated region
        $region118: #{tpu_custom_call.1} parent=116 // pred_check
          %p740 = pneg %p227
        $region119: #{tpu_custom_call.1} parent=116 // pred_check_branch
          %742 = sbr.rel (%p740) target = $region121
        $region120: #{tpu_custom_call.1} parent=116 // pred_region
          %s743 = sand.u32 %s212, 1
          %s744 = scalar_lea.sflag [#allocation9], %s743
          %s745 = sand.u32 %s212, 1
          %s746 = smul.addr %s745, 8
          %s747 = scalar_lea.vmem [#allocation13], %s746
          %749 = dma.done %s744, 128
        $region121: #{tpu_custom_call.1} parent=116 // pred_fallthru
          _
      $region117: #{tpu_custom_call.1} parent=5 // pred_fallthru
        _
    $region6: #{tpu_custom_call.1} parent=1 // loop_footer
      %s33 = sadd.s32 1, %s29
    $region7: #{tpu_custom_call.1} parent=1 // loop_footer_branch
      %28 = sbr.rel target = $region3
    $region8: #{tpu_custom_call.1} parent=1 // loop_exit
      _
    %750 = vsyncpa [#allocation8], 1
    %s751 = scalar_lea.sflag [#allocation8], 1
    %752 = vsyncpa %s751, 1
    %753 = vsyncpa [#allocation11], 1
    %s754 = scalar_lea.sflag [#allocation11], 1
    %755 = vsyncpa %s754, 1
    %756 = vsyncpa [#allocation9], 1
    %s757 = scalar_lea.sflag [#allocation9], 1
    %758 = vsyncpa %s757, 1

</llo_original>
